<compile_context>
chip_gen: v5e
topology: v5e:2x2
jax: 0.10.0
libtpu: 0.0.40
codegen_flags: <defaults>
</compile_context>

<pallas_src>
import jax
import jax.numpy as jnp
from jax.experimental import pallas as pl
from jax.experimental.pallas import tpu as pltpu


def _make_kernel(input_dim, block_k):
    needs_mask = (input_dim % block_k) != 0  # static at trace time

    def kernel(x_ref, w_ref, b_ref, o_ref, acc_ref):
        # x_ref: (TB, TK) VMEM, w_ref: (1, TK) VMEM, b_ref: (1,) SMEM,
        # o_ref: (TB, 1) VMEM, acc_ref: (TB, 1) f32 VMEM scratch.
        k = pl.program_id(1)

        @pl.when(k == 0)
        def _init():
            acc_ref[...] = jnp.zeros_like(acc_ref)

        prod = x_ref[...] * w_ref[...]
        if needs_mask:
            # Zero out the padded columns of the edge K block (garbage otherwise).
            col = jax.lax.broadcasted_iota(jnp.int32, prod.shape, 1) + k * block_k
            prod = jnp.where(col < input_dim, prod, 0.0)
        acc_ref[...] += jnp.sum(prod, axis=-1, keepdims=True)

        @pl.when(k == pl.num_programs(1) - 1)
        def _finalize():
            z = acc_ref[...] + b_ref[0]
            # sigmoid(z) = 1 / (1 + exp(-z)); exp + reciprocal both ride the EUP slot.
            o_ref[...] = (pl.reciprocal(1.0 + jnp.exp(-z), approx=True)
                          ).astype(o_ref.dtype)

    return kernel


def _vmem_budget_bytes():
    """Generation-aware budget for the double-buffered x stream (conservative)."""
    try:
        info = pltpu.get_tpu_info()
        cap = getattr(info, "vmem_capacity_bytes", None)
        if cap:
            # Stay well under the per-TC capacity: safe on v5e (16 MiB scoped default)
            # and v7x (64 MiB physical, both TCs hold their own buffers).
            return max(8 * 1024 * 1024, min(24 * 1024 * 1024, cap // 4))
    except Exception:
        pass
    return 12 * 1024 * 1024


def _choose_tiles(batch, input_dim, itemsize, budget_bytes):
    """Bytes-based tile selection: multi-MiB x tiles, K-tiling only for huge D."""
    # Per-tile x target (double-buffered total stays under budget), capped at 8 MiB.
    tile_target = max(1 << 20, min(8 * 1024 * 1024, budget_bytes // 2))

    # K tile: full D unless even an 8-row tile would not fit the per-tile target.
    if 8 * input_dim * itemsize <= tile_target:
        tk = input_dim
    else:
        tk = max(128, (tile_target // (8 * itemsize)) // 128 * 128)

    # Batch tile: fill the tile target with tk-wide rows, multiple of 8.
    tb = max(8, (tile_target // (tk * itemsize)) // 8 * 8)

    # Never allocate a tile larger than the (sublane-padded) batch.
    batch_padded = ((batch + 7) // 8) * 8
    tb = min(tb, batch_padded)

    # v7x: guarantee >=2 batch grid steps so both TensorCores get work.
    if batch > 8:
        half = ((((batch + 1) // 2) + 7) // 8) * 8  # round_up(cdiv(B, 2), 8)
        tb = min(tb, half)

    return tb, tk


def logistic_regression(x, weight, bias, block_batch=None, block_k=None):
    """x: (B, D), weight: (1, D), bias: (1,) -> sigmoid(x @ W^T + b), shape (B, 1)."""
    B, D = x.shape
    itemsize = x.dtype.itemsize

    auto_tb, auto_tk = _choose_tiles(B, D, itemsize, _vmem_budget_bytes())
    tb = block_batch if block_batch is not None else auto_tb
    tk = block_k if block_k is not None else auto_tk

    grid = (pl.cdiv(B, tb), pl.cdiv(D, tk))

    # Explicit scoped-VMEM limit derived from the chosen tiles (+ headroom for the
    # resident weight tile, output double-buffer, accumulator and internal scratch).
    vmem_limit = int(2 * (tb * tk + tk + tb) * itemsize + tb * 4 + (4 << 20))

    kernel = _make_kernel(D, tk)

    return pl.pallas_call(
        kernel,
        out_shape=jax.ShapeDtypeStruct((B, 1), x.dtype),
        grid_spec=pltpu.PrefetchScalarGridSpec(
            num_scalar_prefetch=0,
            grid=grid,
            in_specs=[
                # x: tiled along batch and (if needed) K -> double-buffered HBM->VMEM.
                pl.BlockSpec((tb, tk), lambda i, k: (i, k)),
                # weight: follows the K tile only; VMEM-resident across batch steps.
                pl.BlockSpec((1, tk), lambda i, k: (0, k)),
                # bias: scalar on the SMEM / scalar path.
                pl.BlockSpec(memory_space=pltpu.MemorySpace.SMEM),
            ],
            out_specs=pl.BlockSpec((tb, 1), lambda i, k: (i, 0)),
            scratch_shapes=[pltpu.VMEM((tb, 1), jnp.float32)],
        ),
        compiler_params=pltpu.CompilerParams(
            dimension_semantics=("parallel", "arbitrary"),
            vmem_limit_bytes=vmem_limit,
        ),
    )(x, weight, bias.reshape(1))


if __name__ == "__main__":
    key = jax.random.PRNGKey(0)
    kx, kw, kb = jax.random.split(key, 3)

    # ---- Small shapes matching the module (common case: single K tile). ----
    batch, input_dim = 24, 32
    x = jax.random.normal(kx, (batch, input_dim), dtype=jnp.float32)
    bound = 1.0 / jnp.sqrt(jnp.float32(input_dim))
    weight = jax.random.uniform(kw, (1, input_dim), minval=-bound, maxval=bound,
                                dtype=jnp.float32)
    bias = jax.random.uniform(kb, (1,), minval=-bound, maxval=bound,
                              dtype=jnp.float32)
    y_ref = jax.nn.sigmoid(x @ weight.T + bias)

    # Auto-chosen tiles (>=2 batch steps since B > 8).
    y = logistic_regression(x, weight, bias)
    jax.block_until_ready(y)
    assert y.shape == (batch, 1)
    assert jnp.allclose(y, y_ref, atol=2e-3, rtol=2e-3)

    # Forced small batch tile to exercise the multi-step pipelined batch grid.
    y_tiled = logistic_regression(x, weight, bias, block_batch=8)
    jax.block_until_ready(y_tiled)
    assert jnp.allclose(y_tiled, y_ref, atol=2e-3, rtol=2e-3)

    # ---- Larger-D case exercising the K-tiled accumulator path (with edge mask). ----
    k2x, k2w, k2b = jax.random.split(jax.random.PRNGKey(1), 3)
    batch2, dim2 = 16, 320  # 320 % 128 != 0 -> padded edge K block is masked
    x2 = jax.random.normal(k2x, (batch2, dim2), dtype=jnp.float32)
    bound2 = 1.0 / jnp.sqrt(jnp.float32(dim2))
    w2 = jax.random.uniform(k2w, (1, dim2), minval=-bound2, maxval=bound2,
                            dtype=jnp.float32)
    b2 = jax.random.uniform(k2b, (1,), minval=-bound2, maxval=bound2,
                            dtype=jnp.float32)
    y2_ref = jax.nn.sigmoid(x2 @ w2.T + b2)

    y2 = logistic_regression(x2, w2, b2, block_batch=8, block_k=128)
    jax.block_until_ready(y2)
    assert y2.shape == (batch2, 1)
    assert jnp.allclose(y2, y2_ref, atol=2e-3, rtol=2e-3)

    print("KERNEL_OK")
</pallas_src>

<mosaic_0001>
module attributes {stable_mosaic.version = 11 : i64} {
  func.func @kernel(%arg0: i32, %arg1: i32, %arg2: memref<16x32xf32, #tpu.memory_space<vmem>>, %arg3: memref<1x32xf32, #tpu.memory_space<vmem>>, %arg4: memref<1xf32, #tpu.memory_space<smem>>, %arg5: memref<16x1xf32, #tpu.memory_space<vmem>>, %arg6: memref<16x1xf32, #tpu.memory_space<vmem>>) attributes {dimension_semantics = [#tpu.dimension_semantics<parallel>, #tpu.dimension_semantics<arbitrary>], iteration_bounds = array<i64: 2, 1>, scalar_prefetch = 0 : i64, scratch_operands = 1 : i64, tpu.core_type = #tpu.core_type<tc>, window_params = [{transform_indices = @transform_0, window_bounds = array<i64: 16, 32>}, {transform_indices = @transform_1, window_bounds = array<i64: 1, 32>}, {transform_indices = @transform_2, window_bounds = array<i64: 1>}, {transform_indices = @transform_3, window_bounds = array<i64: 16, 1>}]} {
    %c0_i32 = arith.constant 0 : i32
    %0 = arith.cmpi eq, %arg1, %c0_i32 : i32
    %1 = arith.extui %0 : i1 to i32
    %c0_i32_0 = arith.constant 0 : i32
    %2 = arith.cmpi ne, %1, %c0_i32_0 : i32
    scf.if %2 {
      %cst_10 = arith.constant 0.000000e+00 : f32
      %15 = vector.broadcast %cst_10 : f32 to vector<16x1xf32>
      %c0_11 = arith.constant 0 : index
      %c0_12 = arith.constant 0 : index
      %16 = vector.load %arg6[%c0_11, %c0_12] : memref<16x1xf32, #tpu.memory_space<vmem>>, vector<16x1xf32>
      tpu.vector_store %arg6[%c0_11, %c0_12], %15 {strides = array<i32>} : memref<16x1xf32, #tpu.memory_space<vmem>>, vector<16x1xf32>,
    } else {
    }
    %c0 = arith.constant 0 : index
    %c0_1 = arith.constant 0 : index
    %3 = vector.load %arg2[%c0, %c0_1] : memref<16x32xf32, #tpu.memory_space<vmem>>, vector<16x32xf32>
    %c0_2 = arith.constant 0 : index
    %c0_3 = arith.constant 0 : index
    %4 = vector.load %arg3[%c0_2, %c0_3] : memref<1x32xf32, #tpu.memory_space<vmem>>, vector<1x32xf32>
    %5 = vector.broadcast %4 : vector<1x32xf32> to vector<16x32xf32>
    %6 = arith.mulf %3, %5 : vector<16x32xf32>
    %c0_4 = arith.constant 0 : index
    %c0_5 = arith.constant 0 : index
    %7 = vector.load %arg6[%c0_4, %c0_5] : memref<16x1xf32, #tpu.memory_space<vmem>>, vector<16x1xf32>
    %cst = arith.constant dense<0.000000e+00> : vector<16xf32>
    %8 = vector.multi_reduction <add>, %6, %cst [1] : vector<16x32xf32> to vector<16xf32>
    %9 = vector.shape_cast %8 : vector<16xf32> to vector<16x1xf32>
    %10 = arith.addf %7, %9 : vector<16x1xf32>
    %c0_6 = arith.constant 0 : index
    %c0_7 = arith.constant 0 : index
    %11 = vector.load %arg6[%c0_6, %c0_7] : memref<16x1xf32, #tpu.memory_space<vmem>>, vector<16x1xf32>
    tpu.vector_store %arg6[%c0_6, %c0_7], %10 {strides = array<i32>} : memref<16x1xf32, #tpu.memory_space<vmem>>, vector<16x1xf32>,
    %c0_i32_8 = arith.constant 0 : i32
    %12 = arith.cmpi eq, %arg1, %c0_i32_8 : i32
    %13 = arith.extui %12 : i1 to i32
    %c0_i32_9 = arith.constant 0 : i32
    %14 = arith.cmpi ne, %13, %c0_i32_9 : i32
    scf.if %14 {
      %c0_10 = arith.constant 0 : index
      %c0_11 = arith.constant 0 : index
      %15 = vector.load %arg6[%c0_10, %c0_11] : memref<16x1xf32, #tpu.memory_space<vmem>>, vector<16x1xf32>
      %c0_12 = arith.constant 0 : index
      %16 = memref.load %arg4[%c0_12] : memref<1xf32, #tpu.memory_space<smem>>
      %17 = vector.broadcast %16 : f32 to vector<16x1xf32>
      %18 = arith.addf %15, %17 : vector<16x1xf32>
      %cst_13 = arith.constant 0.000000e+00 : f32
      %19 = vector.broadcast %cst_13 : f32 to vector<16x1xf32>
      %20 = arith.subf %19, %18 : vector<16x1xf32>
      %21 = math.exp %20 : vector<16x1xf32>
      %cst_14 = arith.constant 1.000000e+00 : f32
      %22 = vector.broadcast %cst_14 : f32 to vector<16x1xf32>
      %23 = arith.addf %22, %21 : vector<16x1xf32>
      %24 = tpu.reciprocal %23 {approx = true} : vector<16x1xf32> -> vector<16x1xf32>
      %c0_15 = arith.constant 0 : index
      %c0_16 = arith.constant 0 : index
      %25 = vector.load %arg5[%c0_15, %c0_16] : memref<16x1xf32, #tpu.memory_space<vmem>>, vector<16x1xf32>
      tpu.vector_store %arg5[%c0_15, %c0_16], %24 {strides = array<i32>} : memref<16x1xf32, #tpu.memory_space<vmem>>, vector<16x1xf32>,
    } else {
    }
    return
  }
  func.func @transform_0(%arg0: i32, %arg1: i32) -> (i32, i32) {
    %c0_i32 = arith.constant 0 : i32
    return %arg0, %arg1 : i32, i32
  }
  func.func @transform_1(%arg0: i32, %arg1: i32) -> (i32, i32) {
    %c0_i32 = arith.constant 0 : i32
    %c0_i32_0 = arith.constant 0 : i32
    return %c0_i32, %arg1 : i32, i32
  }
  func.func @transform_2(%arg0: i32, %arg1: i32) -> i32 {
    %c0_i32 = arith.constant 0 : i32
    %c0_i32_0 = arith.constant 0 : i32
    return %c0_i32 : i32
  }
  func.func @transform_3(%arg0: i32, %arg1: i32) -> (i32, i32) {
    %c0_i32 = arith.constant 0 : i32
    %c0_i32_0 = arith.constant 0 : i32
    return %arg0, %c0_i32 : i32, i32
  }
}

</mosaic_0001>

<llo_original>
// kernel: tpu_custom_call.1
$region0: #{tpu_custom_call.1}
  #allocation0 [shape = 'u32[]', space=smem, size = 0x4, offset = 0x4, fixed_abs, tag = 'smem constant byte address 0x4 - core index']
  #allocation1 [shape = 'u32[72,128]{1,0:T(1,128)}', space=vmem, size = 0x9000, scoped, tag = 'internal scratch']
  #allocation2 [shape = 'f32[16,1]{1,0:T(8,128)}', space=vmem, size = 0x2000, scoped, tag = 'scratch operand']
  #allocation3 [shape = 'f32[1]{0:T(128)S(6)}', space=smem, size = 0x200, scoped, tag = 'scoped memory for tpu_custom_call.1']
  %s0 = inlined_call_operand.hbm [shape: f32[24,32], index: 0, kind: input, shape index: {}]
  %s1 = inlined_call_operand.vmem [shape: f32[1,32], index: 1, kind: input, shape index: {}]
  %s2 = inlined_call_operand.<no memory space> [shape: f32[1], index: 2, kind: input, shape index: {}]
  %s3 = inlined_call_operand.vmem [shape: f32[24,1], index: 3, kind: output, shape index: {}]
  %s4 = sld [smem:[#allocation0]]
  $region105: #{tpu_custom_call.1} parent=0
    _
  %s6 = ssub.s32 1, %s4
  %s7 = scalar_select 0, %s6, %s4
  %8 = sst [smem:[#allocation3]] %s2
  $region1: #{tpu_custom_call.1} parent=0
    #allocation4 [shape = 'u8[16384]{0}', space=vmem, size = 0x4000, scoped, tag = 'input window, operand 0']
    #allocation5 [shape = 's32[2]{0}', space=sflag, size = 0x8, scoped, tag = 'scoped memory for tpu_custom_call.1']
    #allocation6 [shape = 'u8[16384]{0}', space=vmem, size = 0x4000, scoped, tag = 'output window, operand 0']
    %9 = vsyncpa [#allocation5], 0
    %s10 = scalar_lea.sflag [#allocation5], 1
    %11 = vsyncpa %s10, 0
    loop: start=0, step=1, limit=4
    $region2: #{tpu_custom_call.1} parent=1 // loop_pre_header
      _
    $region3: #{tpu_custom_call.1} parent=1 // loop_header
      %s13 = sphi 0, %s17
      %p14 = scmp.ge.s32.totalorder %s13, 4
      %s20 = sphi 0, %s32
      %s21 = sphi 0, %s28
      %s22 = sphi 0, %s20
      %s23 = sphi 0, %s21
      %s24 = sphi 0, %s22
      %s25 = sphi 0, %s23
      %s37 = sphi 0, %s39
      %s40 = sphi 0, %s37
      %s41 = sphi 0, %s40
      %s57 = sphi 0, %s41
      %s63 = sphi 0, %s65
      %s66 = sphi 0, %s63
      %s67 = sphi 0, %s66
      %s83 = sphi 0, %s67
      %s87 = sphi 0, %s87
      %s89 = sphi 0, %s87
      %s90 = sphi 0, %s89
      %s104 = sphi 0, %s90
      %s110 = sphi 0, %s112
      %s113 = sphi 0, %s110
      %s114 = sphi 0, %s113
      %s130 = sphi 0, %s114
    $region4: #{tpu_custom_call.1} parent=1 // loop_header_branch
      %16 = sbr.rel (%p14) target = $region8
    $region5: #{tpu_custom_call.1} parent=1 // loop_body
      %s18 = ssub.s32 %s13, 1
      %s19 = ssub.s32 %s13, 2
      %s26 = sadd.s32 1, %s21
      %p27 = scmp.ge.s32.totalorder %s26, 1
      %s28 = scalar_select %p27, 0, %s26
      %s29 = sadd.s32 1, %s20
      %s30 = scalar_select %p27, %s29, %s20
      %p31 = scmp.ge.s32.totalorder %s30, 2
      %s32 = scalar_select %p31, 0, %s30
      %s33 = ssub.s32 %s20, %s32
      %s34 = ssub.s32 %s21, %s28
      %s35 = sor.u32 %s33, %s34
      %p36 = scmp.eq.s32.totalorder %s35, 0
      %s38 = sadd.s32 %s37, 1
      %s39 = scalar_select %p36, %s37, %s38
      %p42 = pneg %p36
      %p43 = scmp.eq.s32.totalorder %s13, 1
      %p44 = por %p42, %p43
      %p45 = scmp.ne.s32.totalorder %s37, %s40
      %p46 = scmp.eq.s32.totalorder %s13, 0
      %p47 = por %p45, %p46
      %p48 = scmp.ne.s32.totalorder %s37, %s40
      %p49 = scmp.eq.s32.totalorder %s18, 1
      %p50 = por %p48, %p49
      %p51 = scmp.ne.s32.totalorder %s40, %s41
      %p52 = scmp.eq.s32.totalorder %s18, 0
      %p53 = por %p51, %p52
      %p54 = scmp.ne.s32.totalorder %s40, %s41
      %p55 = scmp.eq.s32.totalorder %s19, 1
      %p56 = por %p54, %p55
      %p58 = scmp.ne.s32.totalorder %s41, %s57
      %p59 = scmp.eq.s32.totalorder %s19, 0
      %p60 = por %p58, %p59
      %s61 = ssub.s32 %s21, %s28
      %p62 = scmp.eq.s32.totalorder %s61, 0
      %s64 = sadd.s32 %s63, 1
      %s65 = scalar_select %p62, %s63, %s64
      %p68 = pneg %p62
      %p69 = scmp.eq.s32.totalorder %s13, 1
      %p70 = por %p68, %p69
      %p71 = scmp.ne.s32.totalorder %s63, %s66
      %p72 = scmp.eq.s32.totalorder %s13, 0
      %p73 = por %p71, %p72
      %p74 = scmp.ne.s32.totalorder %s63, %s66
      %p75 = scmp.eq.s32.totalorder %s18, 1
      %p76 = por %p74, %p75
      %p77 = scmp.ne.s32.totalorder %s66, %s67
      %p78 = scmp.eq.s32.totalorder %s18, 0
      %p79 = por %p77, %p78
      %p80 = scmp.ne.s32.totalorder %s66, %s67
      %p81 = scmp.eq.s32.totalorder %s19, 1
      %p82 = por %p80, %p81
      %p84 = scmp.ne.s32.totalorder %s67, %s83
      %p85 = scmp.eq.s32.totalorder %s19, 0
      %p86 = por %p84, %p85
      %s88 = sadd.s32 %s87, 1
      %p91 = scmp.eq.s32.totalorder %s13, 1
      %p92 = scmp.ne.s32.totalorder %s87, %s89
      %p93 = scmp.eq.s32.totalorder %s13, 0
      %p94 = por %p92, %p93
      %p95 = scmp.ne.s32.totalorder %s87, %s89
      %p96 = scmp.eq.s32.totalorder %s18, 1
      %p97 = por %p95, %p96
      %p98 = scmp.ne.s32.totalorder %s89, %s90
      %p99 = scmp.eq.s32.totalorder %s18, 0
      %p100 = por %p98, %p99
      %p101 = scmp.ne.s32.totalorder %s89, %s90
      %p102 = scmp.eq.s32.totalorder %s19, 1
      %p103 = por %p101, %p102
      %p105 = scmp.ne.s32.totalorder %s90, %s104
      %p106 = scmp.eq.s32.totalorder %s19, 0
      %p107 = por %p105, %p106
      %s108 = ssub.s32 %s20, %s32
      %p109 = scmp.eq.s32.totalorder %s108, 0
      %s111 = sadd.s32 %s110, 1
      %s112 = scalar_select %p109, %s110, %s111
      %p115 = pneg %p109
      %p116 = scmp.eq.s32.totalorder %s13, 1
      %p117 = por %p115, %p116
      %p118 = scmp.ne.s32.totalorder %s110, %s113
      %p119 = scmp.eq.s32.totalorder %s13, 0
      %p120 = por %p118, %p119
      %p121 = scmp.ne.s32.totalorder %s110, %s113
      %p122 = scmp.eq.s32.totalorder %s18, 1
      %p123 = por %p121, %p122
      %p124 = scmp.ne.s32.totalorder %s113, %s114
      %p125 = scmp.eq.s32.totalorder %s18, 0
      %p126 = por %p124, %p125
      %p127 = scmp.ne.s32.totalorder %s113, %s114
      %p128 = scmp.eq.s32.totalorder %s19, 1
      %p129 = por %p127, %p128
      %p131 = scmp.ne.s32.totalorder %s114, %s130
      %p132 = scmp.eq.s32.totalorder %s19, 0
      %p133 = por %p131, %p132
      %p134 = scmp.le.s32.totalorder 1, %s13
      %p135 = scmp.lt.s32.totalorder %s13, 3
      %p136 = pnand %p134, %p135
      %p137 = pneg %p136
      // Predicated region
      $region9: #{tpu_custom_call.1} parent=5 // pred_check
        _
      $region10: #{tpu_custom_call.1} parent=5 // pred_check_branch
        %139 = sbr.rel (%p136) target = $region12
      $region11: #{tpu_custom_call.1} parent=5 // pred_region
        %s140 = ssub.s32 %s13, 1
        // Predicated region
        $region13: #{tpu_custom_call.1} parent=11 // pred_check
          %p141 = pneg %p79
        $region14: #{tpu_custom_call.1} parent=11 // pred_check_branch
          %143 = sbr.rel (%p141) target = $region16
        $region15: #{tpu_custom_call.1} parent=11 // pred_region
          %p144 = scmp.lt.s32.totalorder %s23, 0
          %s145 = scalar_select %p144, %s23, 0
          %s146 = scalar_lea.vmem %s1, %s145
        $region16: #{tpu_custom_call.1} parent=11 // pred_fallthru
          _
        // Predicated region
        $region17: #{tpu_custom_call.1} parent=11 // pred_check
          %p147 = pneg %p100
        $region18: #{tpu_custom_call.1} parent=11 // pred_check_branch
          %149 = sbr.rel (%p147) target = $region20
        $region19: #{tpu_custom_call.1} parent=11 // pred_region
          _
        $region20: #{tpu_custom_call.1} parent=11 // pred_fallthru
          _
      $region12: #{tpu_custom_call.1} parent=5 // pred_fallthru
        _
      %p150 = scmp.lt.s32.totalorder %s13, 2
      // Predicated region
      $region21: #{tpu_custom_call.1} parent=5 // pred_check
        %p151 = pneg %p150
      $region22: #{tpu_custom_call.1} parent=5 // pred_check_branch
        %153 = sbr.rel (%p151) target = $region24
      $region23: #{tpu_custom_call.1} parent=5 // pred_region
        // Predicated region
        $region25: #{tpu_custom_call.1} parent=23 // pred_check
          %p154 = pneg %p47
        $region26: #{tpu_custom_call.1} parent=23 // pred_check_branch
          %156 = sbr.rel (%p154) target = $region28
        $region27: #{tpu_custom_call.1} parent=23 // pred_region
          %s157 = sand.u32 %s37, 1
          %s158 = scalar_lea.sflag [#allocation5], %s157
          %s159 = sand.u32 %s37, 1
          %s160 = smul.addr %s159, 16
          %s161 = scalar_lea.vmem [#allocation4], %s160
          %s162 = smul.u32 2, %s20
          %s163 = ssub.s32 3, %s162
          %p164 = scmp.lt.s32.totalorder %s163, 2
          %s165 = scalar_select %p164, %s163, 2
          %s166 = smul.u32 8, %s165
          %s167 = ssub.s32 16, %s166
          %s168 = sshll.u32 %s167, 4
          %169 = vsyncadd %s158, %s168
          %p170 = scmp.ne.s32.totalorder 0, %s166
          %s171 = sadd.s32 %s21, %s162
          %s172 = smul.addr %s171, 8
          %s173 = scalar_lea.hbm %s0, %s172
          %s174 = smul.u32 8, %s165
          %s175 = sshll.u32 %s173, 4
          %s176 = int_to_ptr.hbm [resolvable:$true] %s175
          %s177 = sshll.u32 %s161, 4
          %s178 = int_to_ptr.vmem [resolvable:$true] %s177
          %s179 = sshll.u32 %s174, 4
          %183 = dma.hbm_to_vmem [thread:$0]  (%p170), %s176, %s179, %s178, %s158, 128, 128, 8
        $region28: #{tpu_custom_call.1} parent=23 // pred_fallthru
          _
      $region24: #{tpu_custom_call.1} parent=5 // pred_fallthru
        _
      %p184 = scmp.le.s32.totalorder 1, %s13
      %p185 = scmp.lt.s32.totalorder %s13, 3
      %p186 = pnand %p184, %p185
      %p187 = pneg %p186
      // Predicated region
      $region29: #{tpu_custom_call.1} parent=5 // pred_check
        _
      $region30: #{tpu_custom_call.1} parent=5 // pred_check_branch
        %189 = sbr.rel (%p186) target = $region32
      $region31: #{tpu_custom_call.1} parent=5 // pred_region
        %s190 = ssub.s32 %s13, 1
        %s191 = sand.u32 %s40, 1
        %s192 = scalar_lea.sflag [#allocation5], %s191
        %s193 = sand.u32 %s40, 1
        %s194 = smul.addr %s193, 16
        %s195 = scalar_lea.vmem [#allocation4], %s194
        // Predicated region
        $region33: #{tpu_custom_call.1} parent=31 // pred_check
          %p196 = pneg %p53
        $region34: #{tpu_custom_call.1} parent=31 // pred_check_branch
          %198 = sbr.rel (%p196) target = $region36
        $region35: #{tpu_custom_call.1} parent=31 // pred_region
          %200 = dma.done %s192, 256
        $region36: #{tpu_custom_call.1} parent=31 // pred_fallthru
          _
        %s201 = sand.u32 %s40, 1
        %s202 = scalar_lea.sflag [#allocation5], %s201
        %s203 = sand.u32 %s40, 1
        %s204 = smul.addr %s203, 16
        %s205 = scalar_lea.vmem [#allocation4], %s204
        %p206 = pneg %p53
        %p207 = pneg %p50
        %p208 = scmp.lt.s32.totalorder %s23, 0
        %s209 = scalar_select %p208, %s23, 0
        %s210 = scalar_lea.vmem %s1, %s209
        %p211 = pneg %p79
        %p212 = pneg %p76
        %p213 = pneg %p100
        %p214 = pneg %p97
        %p215 = pneg %p126
        %p216 = pneg %p123
        %s217 = sand.u32 %s113, 1
        %s218 = sand.u32 %s113, 1
        %s219 = smul.addr %s218, 16
        %s220 = scalar_lea.vmem [#allocation6], %s219
        %s221 = smul.u32 2, %s22
        %s222 = ssub.s32 3, %s221
        %p223 = scmp.lt.s32.totalorder %s222, 2
        %s224 = scalar_select %p223, %s222, 2
        %s225 = smul.u32 8, %s224
        %p226 = scmp.lt.s32.totalorder %s23, 0
        %s227 = scalar_select %p226, %s23, 0
        %s228 = scalar_lea.vmem %s1, %s227
        %s229 = smul.u32 2, %s22
        %s230 = ssub.s32 3, %s229
        %p231 = scmp.lt.s32.totalorder %s230, 2
        %s232 = scalar_select %p231, %s230, 2
        %s233 = smul.u32 8, %s232
        %p234 = scmp.eq.s32.totalorder %s23, 0
        // Predicated region
        $region37: #{tpu_custom_call.1} parent=31 // pred_check
          %p235 = pneg %p234
        $region38: #{tpu_custom_call.1} parent=31 // pred_check_branch
          %237 = sbr.rel (%p235) target = $region40
        $region39: #{tpu_custom_call.1} parent=31 // pred_region
          %vm238 = vcmask 7168
          %239 = vst.msk [vmem:[#allocation2] sm:$0xff] %vm238, 0.0
          %240 = vst.msk [vmem:[#allocation2 + $0x8] sm:$0xff] %vm238, 0.0
        $region40: #{tpu_custom_call.1} parent=31 // pred_fallthru
          _
        %v241 = vld [vmem:[%s195] sm:$0xff]
        %v242 = vld [vmem:[%s195 + $0x8] sm:$0xff]
        %v243 = vld [vmem:[%s228] sm:$0x1]
        %v245 = vperm.slane %v243, 0
        %v247 = vmul.f32 %v241, %v245
        %v248 = vmul.f32 %v242, %v245
        %v249 = vld [vmem:[#allocation2] sm:$0xff]
        %v250 = vld [vmem:[#allocation2 + $0x8] sm:$0xff]
        %vm251 = vcmask 261120
        %v252 = vsel %vm251, %v247, 0.0
        %253 = vadd.xlane.f32.xlu0 %v252
        %v254 = vpop.xlane.xlu0 %253
        %v255 = vsel %vm251, %v248, 0.0
        %256 = vadd.xlane.f32.xlu0 %v255
        %v257 = vpop.xlane.xlu0 %256
        %v258 = vadd.f32 %v249, %v254
        %v259 = vadd.f32 %v250, %v257
        %vm260 = vcmask 7168
        %261 = vst.msk [vmem:[#allocation2] sm:$0xff] %vm260, %v258
        %262 = vst.msk [vmem:[#allocation2 + $0x8] sm:$0xff] %vm260, %v259
        // Predicated region
        $region41: #{tpu_custom_call.1} parent=31 // pred_check
          %p263 = pneg %p234
        $region42: #{tpu_custom_call.1} parent=31 // pred_check_branch
          %265 = sbr.rel (%p263) target = $region44
        $region43: #{tpu_custom_call.1} parent=31 // pred_region
          %v266 = vld [vmem:[#allocation2] sm:$0xff]
          %v267 = vld [vmem:[#allocation2 + $0x8] sm:$0xff]
          %s268 = sld [smem:[#allocation3]]
          %v269 = vstv %s268
          %v270 = vadd.f32 %v266, %v269
          %v271 = vadd.f32 %v267, %v269
          %v272 = vsub.f32 0.0, %v270
          %v273 = vsub.f32 0.0, %v271
          %v274 = vmul.f32 %v272, 1.442695
          %v275 = vpow.pop %v274
          %v276 = vmul.f32 %v273, 1.442695
          %v277 = vpow.pop %v276
          %v278 = vadd.f32 %v275, 1.0
          %v279 = vadd.f32 %v277, 1.0
          %v280 = vrcp.pop %v278
          %v281 = vrcp.pop %v279
          %282 = vst.msk [vmem:[%s220] sm:$0xff] %vm260, %v280
          %283 = vst.msk [vmem:[%s220 + $0x8] sm:$0xff] %vm260, %v281
        $region44: #{tpu_custom_call.1} parent=31 // pred_fallthru
          _
        %s284 = sand.u32 %s113, 1
        %s285 = sand.u32 %s113, 1
        %s286 = smul.addr %s285, 16
        %s287 = scalar_lea.vmem [#allocation6], %s286
        // Predicated region
        $region45: #{tpu_custom_call.1} parent=31 // pred_check
          %p288 = pneg %p123
        $region46: #{tpu_custom_call.1} parent=31 // pred_check_branch
          %290 = sbr.rel (%p288) target = $region48
        $region47: #{tpu_custom_call.1} parent=31 // pred_region
          %s291 = smul.u32 2, %s22
          %s292 = ssub.s32 3, %s291
          %p293 = scmp.lt.s32.totalorder %s292, 2
          %s294 = scalar_select %p293, %s292, 2
          %s295 = smul.u32 8, %s294
          %p296 = scmp.ne.s32.totalorder 0, %s295
          %s297 = smul.addr %s291, 8
          %s298 = scalar_lea.vmem %s3, %s297
          // Predicated region
          $region49: #{tpu_custom_call.1} parent=47 // pred_check
            %p299 = pneg %p296
          $region50: #{tpu_custom_call.1} parent=47 // pred_check_branch
            %301 = sbr.rel (%p299) target = $region52
          $region51: #{tpu_custom_call.1} parent=47 // pred_region
            // Predicated region
            $region53: #{tpu_custom_call.1} parent=51 // pred_check
              _
            $region54: #{tpu_custom_call.1} parent=51 // pred_check_branch
              %303 = sbr.rel (0) target = $region56
            $region55: #{tpu_custom_call.1} parent=51 // pred_region
              // Predicated region
              $region75: #{tpu_custom_call.1} parent=55 // pred_check
                _
              $region76: #{tpu_custom_call.1} parent=55 // pred_check_branch
                %355 = sbr.rel (0) target = $region78
              $region77: #{tpu_custom_call.1} parent=55 // pred_region
                %s356 = sshrl.u32 %s294, 1
                // While loop
                $region79: #{tpu_custom_call.1} parent=77 // loop_pre_header
                  _
                $region80: #{tpu_custom_call.1} parent=77 // loop_header
                  %s358 = sphi 0, %s360
                  %p359 = scmp.ge.s32.totalorder %s358, %s356
                  %s363 = sphi 0, %s372
                  %s364 = sphi %s287, %s375
                  %s365 = sphi %s298, %s376
                $region81: #{tpu_custom_call.1} parent=77 // loop_header_branch
                  %362 = sbr.rel (%p359) target = $region85
                $region82: #{tpu_custom_call.1} parent=77 // loop_body
                  %v366 = vld [vmem:[%s364] sm:$0xff]
                  %367 = vst [vmem:[%s365] sm:$0xff] %v366
                  %v368 = vld [vmem:[%s364 + $0x8] sm:$0xff]
                  %369 = vst [vmem:[%s365 + $0x8] sm:$0xff] %v368
                  %s370 = sadd.s32 1, %s363
                  %p371 = scmp.ge.s32.totalorder %s370, %s356
                  %s372 = scalar_select %p371, 0, %s370
                  %s373 = smul.u32 %s372, 16
                  %s374 = smul.u32 %s372, 16
                  %s375 = scalar_lea.vmem %s287, %s373 [#allocation6]
                  %s376 = scalar_lea.vmem %s298, %s374
                $region83: #{tpu_custom_call.1} parent=77 // loop_footer
                  %s360 = sadd.s32 %s358, 1
                $region84: #{tpu_custom_call.1} parent=77 // loop_footer_branch
                  %357 = sbr.rel target = $region80
                $region85: #{tpu_custom_call.1} parent=77 // loop_exit
                  _
                %s377 = sshrl.u32 %s294, 1
                %s378 = sand.u32 %s294, 1
                %s379 = smul.u32 %s377, 2
                %s380 = smul.u32 8, %s379
                %s381 = scalar_lea.vmem %s287, %s380 [#allocation6]
                %s382 = smul.u32 8, %s379
                %s383 = scalar_lea.vmem %s298, %s382
                // While loop
                $region86: #{tpu_custom_call.1} parent=77 // loop_pre_header
                  _
                $region87: #{tpu_custom_call.1} parent=77 // loop_header
                  %s385 = sphi 0, %s387
                  %p386 = scmp.ge.s32.totalorder %s385, %s378
                  %s390 = sphi 0, %s397
                  %s391 = sphi %s381, %s400
                  %s392 = sphi %s383, %s401
                $region88: #{tpu_custom_call.1} parent=77 // loop_header_branch
                  %389 = sbr.rel (%p386) target = $region92
                $region89: #{tpu_custom_call.1} parent=77 // loop_body
                  %v393 = vld [vmem:[%s391] sm:$0xff]
                  %394 = vst [vmem:[%s392] sm:$0xff] %v393
                  %s395 = sadd.s32 1, %s390
                  %p396 = scmp.ge.s32.totalorder %s395, %s378
                  %s397 = scalar_select %p396, 0, %s395
                  %s398 = smul.u32 %s397, 8
                  %s399 = smul.u32 %s397, 8
                  %s400 = scalar_lea.vmem %s381, %s398 [#allocation6]
                  %s401 = scalar_lea.vmem %s383, %s399
                $region90: #{tpu_custom_call.1} parent=77 // loop_footer
                  %s387 = sadd.s32 %s385, 1
                $region91: #{tpu_custom_call.1} parent=77 // loop_footer_branch
                  %384 = sbr.rel target = $region87
                $region92: #{tpu_custom_call.1} parent=77 // loop_exit
                  _
              $region78: #{tpu_custom_call.1} parent=55 // pred_fallthru
                _
              // Predicated region
              $region93: #{tpu_custom_call.1} parent=55 // pred_check
                _
              $region94: #{tpu_custom_call.1} parent=55 // pred_check_branch
                %403 = sbr.rel target = $region96
              $region95: #{tpu_custom_call.1} parent=55 // pred_region
                _
              $region96: #{tpu_custom_call.1} parent=55 // pred_fallthru
                _
            $region56: #{tpu_custom_call.1} parent=51 // pred_fallthru
              _
            // Predicated region
            $region57: #{tpu_custom_call.1} parent=51 // pred_check
              _
            $region58: #{tpu_custom_call.1} parent=51 // pred_check_branch
              %305 = sbr.rel target = $region60
            $region59: #{tpu_custom_call.1} parent=51 // pred_region
              %s307 = ssub.s32 256, 1
              %s308 = sshrl.u32 %s294, 1
              // While loop
              $region61: #{tpu_custom_call.1} parent=59 // loop_pre_header
                _
              $region62: #{tpu_custom_call.1} parent=59 // loop_header
                %s310 = sphi 0, %s312
                %p311 = scmp.ge.s32.totalorder %s310, %s308
                %s315 = sphi 0, %s324
                %s316 = sphi %s287, %s327
                %s317 = sphi %s298, %s328
              $region63: #{tpu_custom_call.1} parent=59 // loop_header_branch
                %314 = sbr.rel (%p311) target = $region67
              $region64: #{tpu_custom_call.1} parent=59 // loop_body
                %v318 = vld [vmem:[%s316] sm:%s307]
                %319 = vst [vmem:[%s317] sm:%s307] %v318
                %v320 = vld [vmem:[%s316 + $0x8] sm:%s307]
                %321 = vst [vmem:[%s317 + $0x8] sm:%s307] %v320
                %s322 = sadd.s32 1, %s315
                %p323 = scmp.ge.s32.totalorder %s322, %s308
                %s324 = scalar_select %p323, 0, %s322
                %s325 = smul.u32 %s324, 16
                %s326 = smul.u32 %s324, 16
                %s327 = scalar_lea.vmem %s287, %s325 [#allocation6]
                %s328 = scalar_lea.vmem %s298, %s326
              $region65: #{tpu_custom_call.1} parent=59 // loop_footer
                %s312 = sadd.s32 %s310, 1
              $region66: #{tpu_custom_call.1} parent=59 // loop_footer_branch
                %309 = sbr.rel target = $region62
              $region67: #{tpu_custom_call.1} parent=59 // loop_exit
                _
              %s329 = sshrl.u32 %s294, 1
              %s330 = sand.u32 %s294, 1
              %s331 = smul.u32 %s329, 2
              %s332 = smul.u32 8, %s331
              %s333 = scalar_lea.vmem %s287, %s332 [#allocation6]
              %s334 = smul.u32 8, %s331
              %s335 = scalar_lea.vmem %s298, %s334
              // While loop
              $region68: #{tpu_custom_call.1} parent=59 // loop_pre_header
                _
              $region69: #{tpu_custom_call.1} parent=59 // loop_header
                %s337 = sphi 0, %s339
                %p338 = scmp.ge.s32.totalorder %s337, %s330
                %s342 = sphi 0, %s349
                %s343 = sphi %s333, %s352
                %s344 = sphi %s335, %s353
              $region70: #{tpu_custom_call.1} parent=59 // loop_header_branch
                %341 = sbr.rel (%p338) target = $region74
              $region71: #{tpu_custom_call.1} parent=59 // loop_body
                %v345 = vld [vmem:[%s343] sm:%s307]
                %346 = vst [vmem:[%s344] sm:%s307] %v345
                %s347 = sadd.s32 1, %s342
                %p348 = scmp.ge.s32.totalorder %s347, %s330
                %s349 = scalar_select %p348, 0, %s347
                %s350 = smul.u32 %s349, 8
                %s351 = smul.u32 %s349, 8
                %s352 = scalar_lea.vmem %s333, %s350 [#allocation6]
                %s353 = scalar_lea.vmem %s335, %s351
              $region72: #{tpu_custom_call.1} parent=59 // loop_footer
                %s339 = sadd.s32 %s337, 1
              $region73: #{tpu_custom_call.1} parent=59 // loop_footer_branch
                %336 = sbr.rel target = $region69
              $region74: #{tpu_custom_call.1} parent=59 // loop_exit
                _
            $region60: #{tpu_custom_call.1} parent=51 // pred_fallthru
              _
          $region52: #{tpu_custom_call.1} parent=47 // pred_fallthru
            _
          %404 = vnop
        $region48: #{tpu_custom_call.1} parent=31 // pred_fallthru
          _
      $region32: #{tpu_custom_call.1} parent=5 // pred_fallthru
        _
      %p405 = scmp.le.s32.totalorder 2, %s13
      // Predicated region
      $region97: #{tpu_custom_call.1} parent=5 // pred_check
        %p406 = pneg %p405
      $region98: #{tpu_custom_call.1} parent=5 // pred_check_branch
        %408 = sbr.rel (%p406) target = $region100
      $region99: #{tpu_custom_call.1} parent=5 // pred_region
        %s409 = ssub.s32 %s13, 2
        // Predicated region
        $region101: #{tpu_custom_call.1} parent=99 // pred_check
          %p410 = pneg %p129
        $region102: #{tpu_custom_call.1} parent=99 // pred_check_branch
          %412 = sbr.rel (%p410) target = $region104
        $region103: #{tpu_custom_call.1} parent=99 // pred_region
          %s413 = sand.u32 %s114, 1
          %s414 = sand.u32 %s114, 1
          %s415 = smul.addr %s414, 16
          %s416 = scalar_lea.vmem [#allocation6], %s415
        $region104: #{tpu_custom_call.1} parent=99 // pred_fallthru
          _
      $region100: #{tpu_custom_call.1} parent=5 // pred_fallthru
        _
    $region6: #{tpu_custom_call.1} parent=1 // loop_footer
      %s17 = sadd.s32 1, %s13
    $region7: #{tpu_custom_call.1} parent=1 // loop_footer_branch
      %12 = sbr.rel target = $region3
    $region8: #{tpu_custom_call.1} parent=1 // loop_exit
      _
    %417 = vsyncpa [#allocation5], 1
    %s418 = scalar_lea.sflag [#allocation5], 1
    %419 = vsyncpa %s418, 1

</llo_original>
